<compile_context>
chip_gen: v6e
topology: v6e:2x2x1
jax: 0.10.0
libtpu: 0.0.40
codegen_flags: <defaults>
</compile_context>

<pallas_src>
import functools

import jax
import jax.numpy as jnp
from jax.experimental import pallas as pl
from jax.experimental.pallas import tpu as pltpu


def _ts_kl_kernel(t_ref, s_ref, o_ref, *, n_rows_total, approx_recip):
    """One grid step: KL(softmax(t) || softmax(s)) summed over the class (lane) axis
    for a (row_tile, N) block; writes this block's scalar partial sum to its own
    output slot (no cross-step state -> grid axis can be 'parallel')."""
    i = pl.program_id(0)
    row_tile = t_ref.shape[0]

    t = t_ref[...].astype(jnp.float32)
    s = s_ref[...].astype(jnp.float32)

    # Numerically-stable log-softmax pieces along the lane (class) axis.
    t_shift = t - jnp.max(t, axis=-1, keepdims=True)
    s_shift = s - jnp.max(s, axis=-1, keepdims=True)
    t_exp = jnp.exp(t_shift)
    s_exp = jnp.exp(s_shift)
    t_sum = jnp.sum(t_exp, axis=-1, keepdims=True)
    s_sum = jnp.sum(s_exp, axis=-1, keepdims=True)

    # KLDivLoss(reduction='none'): target * (log(target) - input) = p_t * (log_p_t - log_p_s)
    # Factor the teacher-softmax division out of the full [rows, N] tensor:
    #   sum_N p_t * diff  =  (1 / t_sum) * sum_N (t_exp * diff)
    diff = (t_shift - s_shift) + (jnp.log(s_sum) - jnp.log(t_sum))   # log_p_t - log_p_s
    weighted_sum = jnp.sum(t_exp * diff, axis=-1, keepdims=True)     # [rows, 1]
    if approx_recip:
        inv_t_sum = pl.reciprocal(t_sum, approx=True)                # EUP slot (fast, ~bf16 accuracy)
    else:
        inv_t_sum = 1.0 / t_sum                                      # exact; [rows,1] is tiny anyway
    row_sum = weighted_sum * inv_t_sum                               # [rows, 1]

    # Mask rows past the logical row count (ragged last tile reads padded garbage).
    row_idx = i * row_tile + jax.lax.broadcasted_iota(jnp.int32, (row_tile, 1), 0)
    row_sum = jnp.where(row_idx < n_rows_total, row_sum, 0.0)

    o_ref[...] = jnp.sum(row_sum).reshape(1, 1)


def _pick_row_tile(n_rows, n_classes, itemsize):
    """Largest row tile (multiple of 8, capped at 1024) such that the two
    double-buffered input blocks stay within a ~8 MiB budget."""
    budget = 8 * 2**20
    per_row = n_classes * itemsize * 4          # 2 inputs x 2 pipeline buffers
    tile = max(8, min(1024, budget // max(per_row, 1)))
    tile = int((tile // 8) * 8)
    rows_pad8 = ((n_rows + 7) // 8) * 8
    return max(8, min(tile, rows_pad8))


def ts_loss_cal(logit_teacher, logit_student, *, row_tile=None, approx_recip=False):
    """JAX/Pallas equivalent of Ts_loss_cal.forward. Returns a scalar float32."""
    assert logit_teacher.shape == logit_student.shape
    n = logit_teacher.shape[-1]
    t2 = logit_teacher.reshape(-1, n)
    s2 = logit_student.reshape(-1, n)
    r = t2.shape[0]
    itemsize = jnp.dtype(t2.dtype).itemsize

    if row_tile is None:
        tile = _pick_row_tile(r, n, itemsize)
    else:
        tile = max(8, int((int(row_tile) // 8) * 8))
        tile = min(tile, ((r + 7) // 8) * 8)

    num_tiles = int(pl.cdiv(r, tile))

    # 2 inputs x 2 pipeline buffers (native dtype) + ~8 f32 block-sized intermediates + headroom.
    # Capped at 64 MiB so the same code is safe on v7x (64 MiB physical VMEM).
    vmem_bytes = 4 * tile * n * itemsize + 8 * tile * n * 4 + (2 << 20)
    vmem_limit = int(min(64 * 2**20, max(32 * 2**20, vmem_bytes)))

    kernel = functools.partial(_ts_kl_kernel, n_rows_total=r, approx_recip=approx_recip)

    partials = pl.pallas_call(
        kernel,
        out_shape=jax.ShapeDtypeStruct((num_tiles, 1), jnp.float32),
        grid_spec=pltpu.PrefetchScalarGridSpec(
            num_scalar_prefetch=0,
            grid=(num_tiles,),
            in_specs=[
                pl.BlockSpec((tile, n), lambda i: (i, 0)),
                pl.BlockSpec((tile, n), lambda i: (i, 0)),
            ],
            out_specs=pl.BlockSpec((1, 1), lambda i: (i, 0)),
        ),
        compiler_params=pltpu.CompilerParams(
            dimension_semantics=("parallel",),      # each tile writes its own block
            vmem_limit_bytes=vmem_limit,
        ),
    )(t2, s2)

    # Final reduce (sum of per-tile partials) + mean over all non-last dims, in plain JAX.
    return jnp.sum(partials) / jnp.float32(r)


def ts_loss_cal_ref(logit_teacher, logit_student):
    """Pure-JAX reference mirroring the PyTorch module exactly."""
    p_t = jax.nn.softmax(logit_teacher, axis=-1)
    p_s = jax.nn.softmax(logit_student, axis=-1)
    log_p_s = jnp.log(p_s)
    loss = p_t * (jnp.log(p_t) - log_p_s)
    return jnp.mean(jnp.sum(loss, axis=-1))


if __name__ == "__main__":
    key = jax.random.PRNGKey(0)
    k1, k2 = jax.random.split(key)

    # Small shapes consistent with the module: (batch=4, seq=8, classes=128) -> 32 rows.
    shape = (4, 8, 128)
    t = jax.random.normal(k1, shape, dtype=jnp.float32)
    s = jax.random.normal(k2, shape, dtype=jnp.float32)
    ref = ts_loss_cal_ref(t, s)

    # 1) default auto tile, exact reciprocal -> tight tolerance vs reference
    out = jax.block_until_ready(ts_loss_cal(t, s))
    assert jnp.allclose(out, ref, atol=1e-5, rtol=1e-5), (out, ref)

    # 2) ragged row count + multi-tile masking path (40 rows, tile=16 -> 3 tiles, last ragged)
    t_r = jax.random.normal(k1, (5, 8, 128), dtype=jnp.float32)
    s_r = jax.random.normal(k2, (5, 8, 128), dtype=jnp.float32)
    out_r = jax.block_until_ready(ts_loss_cal(t_r, s_r, row_tile=16))
    ref_r = ts_loss_cal_ref(t_r, s_r)
    assert jnp.allclose(out_r, ref_r, atol=1e-5, rtol=1e-5), (out_r, ref_r)

    # 3) approx EUP reciprocal (perf mode) -> loose tolerance (few-ULP per-row normalizer)
    out_a = jax.block_until_ready(ts_loss_cal(t, s, approx_recip=True))
    assert jnp.allclose(out_a, ref, atol=2e-2, rtol=2e-2), (out_a, ref)

    # 4) bf16 inputs (half the HBM traffic); compare to f32 reference of the rounded inputs
    t_bf = t.astype(jnp.bfloat16)
    s_bf = s.astype(jnp.bfloat16)
    out_bf = jax.block_until_ready(ts_loss_cal(t_bf, s_bf))
    ref_bf = ts_loss_cal_ref(t_bf.astype(jnp.float32), s_bf.astype(jnp.float32))
    assert jnp.allclose(out_bf, ref_bf, atol=1e-5, rtol=1e-5), (out_bf, ref_bf)

    print("KERNEL_OK")
</pallas_src>

<mosaic_0001>
module attributes {stable_mosaic.version = 11 : i64} {
  func.func @_ts_kl_kernel(%arg0: i32, %arg1: memref<32x128xf32, #tpu.memory_space<vmem>>, %arg2: memref<32x128xf32, #tpu.memory_space<vmem>>, %arg3: memref<1x1xf32, #tpu.memory_space<vmem>>) attributes {dimension_semantics = [#tpu.dimension_semantics<parallel>], iteration_bounds = array<i64: 1>, scalar_prefetch = 0 : i64, scratch_operands = 0 : i64, tpu.core_type = #tpu.core_type<tc>, window_params = [{transform_indices = @transform_0, window_bounds = array<i64: 32, 128>}, {transform_indices = @transform_1, window_bounds = array<i64: 32, 128>}, {transform_indices = @transform_2, window_bounds = array<i64: 1, 1>}]} {
    %c0 = arith.constant 0 : index
    %c0_0 = arith.constant 0 : index
    %0 = vector.load %arg1[%c0, %c0_0] : memref<32x128xf32, #tpu.memory_space<vmem>>, vector<32x128xf32>
    %c0_1 = arith.constant 0 : index
    %c0_2 = arith.constant 0 : index
    %1 = vector.load %arg2[%c0_1, %c0_2] : memref<32x128xf32, #tpu.memory_space<vmem>>, vector<32x128xf32>
    %cst = arith.constant dense<0xFF800000> : vector<32xf32>
    %2 = vector.multi_reduction <maximumf>, %0, %cst [1] : vector<32x128xf32> to vector<32xf32>
    %3 = vector.shape_cast %2 : vector<32xf32> to vector<32x1xf32>
    %4 = vector.broadcast %3 : vector<32x1xf32> to vector<32x128xf32>
    %5 = arith.subf %0, %4 : vector<32x128xf32>
    %cst_3 = arith.constant dense<0xFF800000> : vector<32xf32>
    %6 = vector.multi_reduction <maximumf>, %1, %cst_3 [1] : vector<32x128xf32> to vector<32xf32>
    %7 = vector.shape_cast %6 : vector<32xf32> to vector<32x1xf32>
    %8 = vector.broadcast %7 : vector<32x1xf32> to vector<32x128xf32>
    %9 = arith.subf %1, %8 : vector<32x128xf32>
    %10 = math.exp %5 : vector<32x128xf32>
    %11 = math.exp %9 : vector<32x128xf32>
    %cst_4 = arith.constant dense<0.000000e+00> : vector<32xf32>
    %12 = vector.multi_reduction <add>, %10, %cst_4 [1] : vector<32x128xf32> to vector<32xf32>
    %13 = vector.shape_cast %12 : vector<32xf32> to vector<32x1xf32>
    %cst_5 = arith.constant dense<0.000000e+00> : vector<32xf32>
    %14 = vector.multi_reduction <add>, %11, %cst_5 [1] : vector<32x128xf32> to vector<32xf32>
    %15 = vector.shape_cast %14 : vector<32xf32> to vector<32x1xf32>
    %16 = arith.subf %5, %9 : vector<32x128xf32>
    %17 = math.log %15 : vector<32x1xf32>
    %18 = math.log %13 : vector<32x1xf32>
    %19 = arith.subf %17, %18 : vector<32x1xf32>
    %20 = vector.broadcast %19 : vector<32x1xf32> to vector<32x128xf32>
    %21 = arith.addf %16, %20 : vector<32x128xf32>
    %22 = arith.mulf %10, %21 : vector<32x128xf32>
    %cst_6 = arith.constant dense<0.000000e+00> : vector<32xf32>
    %23 = vector.multi_reduction <add>, %22, %cst_6 [1] : vector<32x128xf32> to vector<32xf32>
    %24 = vector.shape_cast %23 : vector<32xf32> to vector<32x1xf32>
    %cst_7 = arith.constant 1.000000e+00 : f32
    %25 = vector.broadcast %cst_7 : f32 to vector<32x1xf32>
    %26 = arith.divf %25, %13 : vector<32x1xf32>
    %27 = arith.mulf %24, %26 : vector<32x1xf32>
    %c32_i32 = arith.constant 32 : i32
    %28 = arith.muli %arg0, %c32_i32 : i32
    %29 = tpu.iota {dimensions = array<i32: 0>} : vector<32x1xi32>
    %30 = vector.broadcast %28 : i32 to vector<32x1xi32>
    %31 = arith.addi %30, %29 : vector<32x1xi32>
    %c32_i32_8 = arith.constant 32 : i32
    %32 = vector.broadcast %c32_i32_8 : i32 to vector<32x1xi32>
    %33 = arith.cmpi slt, %31, %32 : vector<32x1xi32>
    %cst_9 = arith.constant 0.000000e+00 : f32
    %34 = vector.broadcast %cst_9 : f32 to vector<32x1xf32>
    %35 = arith.select %33, %27, %34 : vector<32x1xi1>, vector<32x1xf32>
    %36 = vector.shape_cast %35 : vector<32x1xf32> to vector<1x32x1xf32>
    %cst_10 = arith.constant dense<0.000000e+00> : vector<1xf32>
    %37 = vector.multi_reduction <add>, %36, %cst_10 [1, 2] : vector<1x32x1xf32> to vector<1xf32>
    %38 = vector.shape_cast %37 : vector<1xf32> to vector<1x1x1xf32>
    %39 = vector.extract %38[0, 0, 0] : f32 from vector<1x1x1xf32>
    %40 = vector.broadcast %39 : f32 to vector<1x1xf32>
    %c0_11 = arith.constant 0 : index
    %c0_12 = arith.constant 0 : index
    %41 = vector.load %arg3[%c0_11, %c0_12] : memref<1x1xf32, #tpu.memory_space<vmem>>, vector<1x1xf32>
    tpu.vector_store %arg3[%c0_11, %c0_12], %40 {strides = array<i32>} : memref<1x1xf32, #tpu.memory_space<vmem>>, vector<1x1xf32>,
    return
  }
  func.func @transform_0(%arg0: i32) -> (i32, i32) {
    %c0_i32 = arith.constant 0 : i32
    %c0_i32_0 = arith.constant 0 : i32
    return %arg0, %c0_i32 : i32, i32
  }
  func.func @transform_1(%arg0: i32) -> (i32, i32) {
    %c0_i32 = arith.constant 0 : i32
    %c0_i32_0 = arith.constant 0 : i32
    return %arg0, %c0_i32 : i32, i32
  }
  func.func @transform_2(%arg0: i32) -> (i32, i32) {
    %c0_i32 = arith.constant 0 : i32
    %c0_i32_0 = arith.constant 0 : i32
    return %arg0, %c0_i32 : i32, i32
  }
}

</mosaic_0001>

<llo_original>
// kernel: tpu_custom_call.1
$region0: #{tpu_custom_call.1}
  #allocation0 [shape = 'u32[]', space=smem, size = 0x4, offset = 0x4, fixed_abs, tag = 'smem constant byte address 0x4 - core index']
  #allocation1 [shape = 'u32[144,128]{1,0:T(1,128)}', space=vmem, size = 0x12000, scoped, tag = 'internal scratch']
  %s0 = inlined_call_operand.hbm [shape: f32[32,128], index: 0, kind: input, shape index: {}]
  %s1 = inlined_call_operand.hbm [shape: f32[32,128], index: 1, kind: input, shape index: {}]
  %s2 = inlined_call_operand.hbm [shape: f32[1,1], index: 2, kind: output, shape index: {}]
  %s3 = sld [smem:[#allocation0]]
  $region26: #{tpu_custom_call.1} parent=0
    _
  %s5 = ssub.s32 1, %s3
  %s6 = scalar_select 0, %s5, %s3
  $region1: #{tpu_custom_call.1} parent=0
    #allocation2 [shape = 'u8[16384]{0}', space=vmem, size = 0x4000, scoped, tag = 'input window, operand 0, single buffered']
    #allocation3 [shape = 's32[1]{0}', space=sflag, size = 0x4, scoped, tag = 'scoped memory for tpu_custom_call.1']
    #allocation4 [shape = 's32[1]{0}', space=sflag, size = 0x4, scoped, tag = 'scoped memory for tpu_custom_call.1']
    #allocation5 [shape = 'u8[16384]{0}', space=vmem, size = 0x4000, scoped, tag = 'input window, operand 1, single buffered']
    #allocation6 [shape = 's32[1]{0}', space=sflag, size = 0x4, scoped, tag = 'scoped memory for tpu_custom_call.1']
    #allocation7 [shape = 'u8[512]{0}', space=vmem, size = 0x400, scoped, tag = 'output window, operand 0, single buffered']
    %7 = vsyncpa [#allocation3], 0
    %8 = vsyncpa [#allocation6], 0
    %9 = vsyncpa [#allocation4], 0
    // Predicated region
    $region2: #{tpu_custom_call.1} parent=1 // pred_check
      _
    $region3: #{tpu_custom_call.1} parent=1 // pred_check_branch
      %11 = sbr.rel (0) target = $region5
    $region4: #{tpu_custom_call.1} parent=1 // pred_region
      %s13 = ssub.s32 512, 512
      %14 = vsyncadd [#allocation3], %s13
      %s15 = sshll.u32 [#allocation2], 4
      %s16 = int_to_ptr.vmem [resolvable:$true] %s15
      %21 = dma.hbm_to_vmem [thread:$0]  %s0, 512, %s16, [#allocation3], 128, 128, 8
    $region5: #{tpu_custom_call.1} parent=1 // pred_fallthru
      _
    // Predicated region
    $region6: #{tpu_custom_call.1} parent=1 // pred_check
      _
    $region7: #{tpu_custom_call.1} parent=1 // pred_check_branch
      %23 = sbr.rel (0) target = $region9
    $region8: #{tpu_custom_call.1} parent=1 // pred_region
      %s25 = ssub.s32 512, 512
      %26 = vsyncadd [#allocation6], %s25
      %s27 = sshll.u32 [#allocation5], 4
      %s28 = int_to_ptr.vmem [resolvable:$true] %s27
      %33 = dma.hbm_to_vmem [thread:$0]  %s1, 512, %s28, [#allocation6], 128, 128, 8
    $region9: #{tpu_custom_call.1} parent=1 // pred_fallthru
      _
    // Predicated region
    $region10: #{tpu_custom_call.1} parent=1 // pred_check
      _
    $region11: #{tpu_custom_call.1} parent=1 // pred_check_branch
      %35 = sbr.rel (0) target = $region13
    $region12: #{tpu_custom_call.1} parent=1 // pred_region
      %36 = dma.done [#allocation3], 512
    $region13: #{tpu_custom_call.1} parent=1 // pred_fallthru
      _
    // Predicated region
    $region14: #{tpu_custom_call.1} parent=1 // pred_check
      _
    $region15: #{tpu_custom_call.1} parent=1 // pred_check_branch
      %38 = sbr.rel (0) target = $region17
    $region16: #{tpu_custom_call.1} parent=1 // pred_region
      %39 = dma.done [#allocation6], 512
    $region17: #{tpu_custom_call.1} parent=1 // pred_fallthru
      _
    %v40 = vld [vmem:[#allocation2] sm:$0xff]
    %v41 = vld [vmem:[#allocation2 + $0x8] sm:$0xff]
    %v42 = vld [vmem:[#allocation2 + $0x10] sm:$0xff]
    %v43 = vld [vmem:[#allocation2 + $0x18] sm:$0xff]
    %v44 = vld [vmem:[#allocation5] sm:$0xff]
    %v45 = vld [vmem:[#allocation5 + $0x8] sm:$0xff]
    %v46 = vld [vmem:[#allocation5 + $0x10] sm:$0xff]
    %v47 = vld [vmem:[#allocation5 + $0x18] sm:$0xff]
    %48 = vmax.xlane.f32.xlu0 %v40
    %v49 = vpop.xlane.xlu0 %48
    %50 = vmax.xlane.f32.xlu0 %v41
    %v51 = vpop.xlane.xlu0 %50
    %52 = vmax.xlane.f32.xlu0 %v42
    %v53 = vpop.xlane.xlu0 %52
    %54 = vmax.xlane.f32.xlu0 %v43
    %v55 = vpop.xlane.xlu0 %54
    %v56 = vsub.f32 %v40, %v49
    %v57 = vsub.f32 %v41, %v51
    %v58 = vsub.f32 %v42, %v53
    %v59 = vsub.f32 %v43, %v55
    %60 = vmax.xlane.f32.xlu0 %v44
    %v61 = vpop.xlane.xlu0 %60
    %62 = vmax.xlane.f32.xlu0 %v45
    %v63 = vpop.xlane.xlu0 %62
    %64 = vmax.xlane.f32.xlu0 %v46
    %v65 = vpop.xlane.xlu0 %64
    %66 = vmax.xlane.f32.xlu0 %v47
    %v67 = vpop.xlane.xlu0 %66
    %v68 = vsub.f32 %v44, %v61
    %v69 = vsub.f32 %v45, %v63
    %v70 = vsub.f32 %v46, %v65
    %v71 = vsub.f32 %v47, %v67
    %v72 = vmul.f32 %v56, 1.442695
    %v73 = vpow.pop %v72
    %v74 = vmul.f32 %v57, 1.442695
    %v75 = vpow.pop %v74
    %v76 = vmul.f32 %v58, 1.442695
    %v77 = vpow.pop %v76
    %v78 = vmul.f32 %v59, 1.442695
    %v79 = vpow.pop %v78
    %v80 = vmul.f32 %v68, 1.442695
    %v81 = vpow.pop %v80
    %v82 = vmul.f32 %v69, 1.442695
    %v83 = vpow.pop %v82
    %v84 = vmul.f32 %v70, 1.442695
    %v85 = vpow.pop %v84
    %v86 = vmul.f32 %v71, 1.442695
    %v87 = vpow.pop %v86
    %88 = vadd.xlane.f32.xlu0 %v73
    %v89 = vpop.xlane.xlu0 %88
    %90 = vadd.xlane.f32.xlu0 %v75
    %v91 = vpop.xlane.xlu0 %90
    %92 = vadd.xlane.f32.xlu0 %v77
    %v93 = vpop.xlane.xlu0 %92
    %94 = vadd.xlane.f32.xlu0 %v79
    %v95 = vpop.xlane.xlu0 %94
    %96 = vadd.xlane.f32.xlu0 %v81
    %v97 = vpop.xlane.xlu0 %96
    %98 = vadd.xlane.f32.xlu0 %v83
    %v99 = vpop.xlane.xlu0 %98
    %100 = vadd.xlane.f32.xlu0 %v85
    %v101 = vpop.xlane.xlu0 %100
    %102 = vadd.xlane.f32.xlu0 %v87
    %v103 = vpop.xlane.xlu0 %102
    %v104 = vsub.f32 %v56, %v68
    %v105 = vsub.f32 %v57, %v69
    %v106 = vsub.f32 %v58, %v70
    %v107 = vsub.f32 %v59, %v71
    %v108 = vlog2.pop %v97
    %v109 = vmul.f32 %v108, 0.6931472
    %v110 = vlog2.pop %v99
    %v111 = vmul.f32 %v110, 0.6931472
    %v112 = vlog2.pop %v101
    %v113 = vmul.f32 %v112, 0.6931472
    %v114 = vlog2.pop %v103
    %v115 = vmul.f32 %v114, 0.6931472
    %v116 = vlog2.pop %v89
    %v117 = vmul.f32 %v116, 0.6931472
    %v118 = vlog2.pop %v91
    %v119 = vmul.f32 %v118, 0.6931472
    %v120 = vlog2.pop %v93
    %v121 = vmul.f32 %v120, 0.6931472
    %v122 = vlog2.pop %v95
    %v123 = vmul.f32 %v122, 0.6931472
    %v124 = vsub.f32 %v109, %v117
    %v125 = vsub.f32 %v111, %v119
    %v126 = vsub.f32 %v113, %v121
    %v127 = vsub.f32 %v115, %v123
    %v128 = vadd.f32 %v104, %v124
    %v129 = vadd.f32 %v105, %v125
    %v130 = vadd.f32 %v106, %v126
    %v131 = vadd.f32 %v107, %v127
    %v132 = vmul.f32 %v73, %v128
    %v133 = vmul.f32 %v75, %v129
    %v134 = vmul.f32 %v77, %v130
    %v135 = vmul.f32 %v79, %v131
    %136 = vadd.xlane.f32.xlu0 %v132
    %v137 = vpop.xlane.xlu0 %136
    %138 = vadd.xlane.f32.xlu0 %v133
    %v139 = vpop.xlane.xlu0 %138
    %140 = vadd.xlane.f32.xlu0 %v134
    %v141 = vpop.xlane.xlu0 %140
    %142 = vadd.xlane.f32.xlu0 %v135
    %v143 = vpop.xlane.xlu0 %142
    %v144 = vrcp.pop %v89
    %v145 = vmul.f32 1.0, %v144
    %v146 = vrcp.pop %v91
    %v147 = vmul.f32 1.0, %v146
    %v148 = vrcp.pop %v93
    %v149 = vmul.f32 1.0, %v148
    %v150 = vrcp.pop %v95
    %v151 = vmul.f32 1.0, %v150
    %v152 = vmul.f32 %v137, %v145
    %v153 = vmul.f32 %v139, %v147
    %v154 = vmul.f32 %v141, %v149
    %v155 = vmul.f32 %v143, %v151
    %s156 = smul.u32 0, 32
    %v157 = vlaneseq
    %v158 = vshrl.u32 %v157, 7
    %v159 = vadd.s32 %v158, 8
    %v160 = vadd.s32 %v158, 16
    %v161 = vadd.s32 %v158, 24
    %v162 = vstv %s156
    %v163 = vadd.s32 %v162, %v158
    %v164 = vadd.s32 %v162, %v159
    %v165 = vadd.s32 %v162, %v160
    %v166 = vadd.s32 %v162, %v161
    %vm167 = vcmp.lt.s32.totalorder %v163, 32
    %vm168 = vcmp.lt.s32.totalorder %v164, 32
    %vm169 = vcmp.lt.s32.totalorder %v165, 32
    %vm170 = vcmp.lt.s32.totalorder %v166, 32
    %v171 = vsel %vm167, %v152, 0.0
    %v172 = vsel %vm168, %v153, 0.0
    %v173 = vsel %vm169, %v154, 0.0
    %v174 = vsel %vm170, %v155, 0.0
    %vm175 = vcmask 7168
    %v176 = vsel %vm175, %v171, 0.0
    %v177 = vsel %vm175, %v172, 0.0
    %v178 = vadd.f32 %v176, %v177
    %v179 = vsel %vm175, %v173, 0.0
    %v180 = vadd.f32 %v178, %v179
    %v181 = vsel %vm175, %v174, 0.0
    %v182 = vadd.f32 %v180, %v181
    %183 = vadd.xlane.f32.xlu0 %v182
    %v184 = vpop.xlane.xlu0 %183
    %v185 = vrot.slane %v184, 4
    %v186 = vadd.f32 %v184, %v185
    %v187 = vrot.slane %v186, 2
    %v188 = vadd.f32 %v186, %v187
    %v189 = vrot.slane %v188, 1
    %v190 = vadd.f32 %v188, %v189
    %s191 = vtos %v190
    %v192 = vstv %s191
    %vm193 = vcmask 0
    %194 = vst.msk [vmem:[#allocation7] sm:$0x1] %vm193, %v192
    // Predicated region
    $region18: #{tpu_custom_call.1} parent=1 // pred_check
      _
    $region19: #{tpu_custom_call.1} parent=1 // pred_check_branch
      %196 = sbr.rel (0) target = $region21
    $region20: #{tpu_custom_call.1} parent=1 // pred_region
      %s198 = ssub.s32 16, 16
      %199 = vsyncadd [#allocation4], %s198
      %s201 = sshll.u32 [#allocation7], 4
      %s202 = int_to_ptr.vmem [resolvable:$true] %s201
      %204 = dma.vmem_to_hbm [thread:$0]  %s202, 16, %s2, [#allocation4]
    $region21: #{tpu_custom_call.1} parent=1 // pred_fallthru
      _
    // Predicated region
    $region22: #{tpu_custom_call.1} parent=1 // pred_check
      _
    $region23: #{tpu_custom_call.1} parent=1 // pred_check_branch
      %206 = sbr.rel (0) target = $region25
    $region24: #{tpu_custom_call.1} parent=1 // pred_region
      %207 = dma.done [#allocation4], 16
    $region25: #{tpu_custom_call.1} parent=1 // pred_fallthru
      _
    %208 = vsyncpa [#allocation3], 1
    %209 = vsyncpa [#allocation6], 1
    %210 = vsyncpa [#allocation4], 1

</llo_original>
